<compile_context>
chip_gen: v6e
topology: v6e:2x2x1
jax: 0.10.0
libtpu: 0.0.40
codegen_flags: <defaults>
</compile_context>

<pallas_src>
import jax
import jax.numpy as jnp
from jax.experimental import pallas as pl
from jax.experimental.pallas import tpu as pltpu

NEG_SLOPE = 0.2


def _leaky(a):
    return jnp.where(a > 0, a, NEG_SLOPE * a)


def _build_taps(src_ref, img_off, tap_ref, m_left, m_right, C, W, HW):
    """Pack the nine 3x3-conv taps of a (C, HW) image into tap_ref.

    `src_ref` holds the image flattened row-major starting at lane `img_off`,
    with >= W+1 zero lanes before and after it (top/bottom zero-pad rows plus
    guard lanes).  Tap t = ky*3 + kx is written to rows [t*C, (t+1)*C).
    The conv's left/right zero padding is applied via the two column masks.
    """
    base = img_off - W - 1
    for ky in range(3):
        for kx in range(3):
            start = base + ky * W + kx
            v = src_ref[:, start:start + HW]          # (C, HW) lane slice
            if kx == 0:
                v = v * m_left                        # zero out column x == 0
            elif kx == 2:
                v = v * m_right                       # zero out column x == W-1
            t = ky * 3 + kx
            tap_ref[t * C:(t + 1) * C, :] = v


def _make_resblock_kernel(C, H, W):
    HW = H * W
    sx = W + 1                              # image offset inside conv0 input
    sh = ((W + 1 + 127) // 128) * 128       # lane-aligned image offset for h

    def kernel(xg_ref, w0_ref, b0_ref, w1_ref, b1_ref, mask_ref,
               out_ref, tap_ref, hpad_ref):
        # Zero the h staging buffer once; its pad lanes stay zero afterwards
        # and its image lanes are fully overwritten every grid step.
        @pl.when(pl.program_id(0) == 0)
        def _():
            hpad_ref[...] = jnp.zeros_like(hpad_ref)

        m_left = mask_ref[0:1, :]
        m_right = mask_ref[1:2, :]

        # ---- conv0 + bias + LeakyReLU ---------------------------------
        _build_taps(xg_ref, sx, tap_ref, m_left, m_right, C, W, HW)
        h = jnp.dot(w0_ref[...], tap_ref[...],
                    preferred_element_type=jnp.float32)   # (C, HW), one K=9C matmul
        h = _leaky(h + b0_ref[...])
        hpad_ref[:, sh:sh + HW] = h          # stage h; never leaves VMEM

        # ---- conv1 + bias + residual + LeakyReLU ----------------------
        _build_taps(hpad_ref, sh, tap_ref, m_left, m_right, C, W, HW)
        y = jnp.dot(w1_ref[...], tap_ref[...],
                    preferred_element_type=jnp.float32)
        y = y + b1_ref[...] + xg_ref[:, sx:sx + HW]        # residual from resident x
        out_ref[...] = _leaky(y).astype(out_ref.dtype)

    return kernel


def dis_resblock_forward(x_nchw, params):
    """Dis_ResBlock.forward; input/output in PyTorch NCHW layout."""
    N, C, H, W = x_nchw.shape
    HW = H * W
    glen_x = (H + 2) * W + 2
    sh = ((W + 1 + 127) // 128) * 128
    glen_h = sh + HW + W + 1
    dt = x_nchw.dtype

    # Light glue only: one zero row above/below, flatten rows, one guard lane
    # on each end  ->  (N, C, (H+2)*W + 2).  No 9x im2col materialization.
    xh = jnp.pad(x_nchw, ((0, 0), (0, 0), (1, 1), (0, 0)))
    xg = jnp.pad(xh.reshape(N, C, (H + 2) * W), ((0, 0), (0, 0), (1, 1)))

    # Conv weights (Cout, Cin, 3, 3) -> (Cout, 9*Cin); column order
    # (ky*3 + kx)*Cin + ci matches the in-kernel tap layout.
    w0m = jnp.transpose(params["w0"], (0, 2, 3, 1)).reshape(C, 9 * C)
    w1m = jnp.transpose(params["w1"], (0, 2, 3, 1)).reshape(C, 9 * C)
    b0 = params["b0"].reshape(C, 1)
    b1 = params["b1"].reshape(C, 1)

    # Lane masks implementing the conv's left/right zero padding.
    col = jnp.arange(HW, dtype=jnp.int32) % W
    masks = jnp.stack([(col != 0), (col != W - 1)]).astype(dt)   # (2, HW)

    out = pl.pallas_call(
        _make_resblock_kernel(C, H, W),
        out_shape=jax.ShapeDtypeStruct((N, C, HW), dt),
        grid=(N,),
        in_specs=[
            pl.BlockSpec((None, C, glen_x), lambda n: (n, 0, 0)),   # padded x
            pl.BlockSpec((C, 9 * C), lambda n: (0, 0)),             # w0
            pl.BlockSpec((C, 1), lambda n: (0, 0)),                 # b0
            pl.BlockSpec((C, 9 * C), lambda n: (0, 0)),             # w1
            pl.BlockSpec((C, 1), lambda n: (0, 0)),                 # b1
            pl.BlockSpec((2, HW), lambda n: (0, 0)),                # edge masks
        ],
        out_specs=pl.BlockSpec((None, C, HW), lambda n: (n, 0, 0)),
        scratch_shapes=[
            pltpu.VMEM((9 * C, HW), jnp.float32),    # packed taps (K = 9*Cin)
            pltpu.VMEM((C, glen_h), jnp.float32),    # padded intermediate h
        ],
        compiler_params=pltpu.CompilerParams(
            dimension_semantics=("parallel",)),
    )(xg, w0m, b0, w1m, b1, masks)
    return out.reshape(N, C, H, W)


def _reference(x, p):
    """Pure-JAX/XLA reference of the PyTorch forward for a correctness check."""
    def conv(x, w, b):
        y = jax.lax.conv_general_dilated(
            x, w, (1, 1), ((1, 1), (1, 1)),
            dimension_numbers=("NCHW", "OIHW", "NCHW"))
        return y + b[None, :, None, None]

    h = _leaky(conv(x, p["w0"], p["b0"]))
    return _leaky(conv(h, p["w1"], p["b1"]) + x)


if __name__ == "__main__":
    # Small shapes consistent with the module; residual forces Cin == Cout.
    N, C, H, W = 2, 4, 16, 16

    key = jax.random.PRNGKey(0)
    k_x, k0w, k0b, k1w, k1b = jax.random.split(key, 5)

    x = jax.random.normal(k_x, (N, C, H, W), dtype=jnp.float32)

    # Deterministic init mimicking nn.Conv2d default (uniform in +-1/sqrt(fan_in)).
    bound = float(1.0 / (C * 9) ** 0.5)
    params = {
        "w0": jax.random.uniform(k0w, (C, C, 3, 3), jnp.float32, -bound, bound),
        "b0": jax.random.uniform(k0b, (C,), jnp.float32, -bound, bound),
        "w1": jax.random.uniform(k1w, (C, C, 3, 3), jnp.float32, -bound, bound),
        "b1": jax.random.uniform(k1b, (C,), jnp.float32, -bound, bound),
    }

    out = jax.jit(dis_resblock_forward)(x, params)
    out = jax.block_until_ready(out)

    ref = _reference(x, params)
    assert out.shape == (N, C, H, W) and out.dtype == jnp.float32
    assert jnp.allclose(out, ref, atol=1e-4, rtol=1e-4), float(
        jnp.max(jnp.abs(out - ref)))

    print("KERNEL_OK")
</pallas_src>

<mosaic_0001>
module attributes {stable_mosaic.version = 11 : i64} {
  func.func @kernel(%arg0: i32, %arg1: memref<1x4x290xf32, #tpu.memory_space<vmem>>, %arg2: memref<4x36xf32, #tpu.memory_space<vmem>>, %arg3: memref<4x1xf32, #tpu.memory_space<vmem>>, %arg4: memref<4x36xf32, #tpu.memory_space<vmem>>, %arg5: memref<4x1xf32, #tpu.memory_space<vmem>>, %arg6: memref<2x256xf32, #tpu.memory_space<vmem>>, %arg7: memref<1x4x256xf32, #tpu.memory_space<vmem>>, %arg8: memref<36x256xf32, #tpu.memory_space<vmem>>, %arg9: memref<4x401xf32, #tpu.memory_space<vmem>>) attributes {dimension_semantics = [#tpu.dimension_semantics<parallel>], iteration_bounds = array<i64: 2>, scalar_prefetch = 0 : i64, scratch_operands = 2 : i64, tpu.core_type = #tpu.core_type<tc>, window_params = [{transform_indices = @transform_0, window_bounds = array<i64: 1, 4, 290>}, {pipeline_mode = #tpu.pipeline_mode<synchronous>, transform_indices = @transform_1, window_bounds = array<i64: 4, 36>}, {pipeline_mode = #tpu.pipeline_mode<synchronous>, transform_indices = @transform_2, window_bounds = array<i64: 4, 1>}, {pipeline_mode = #tpu.pipeline_mode<synchronous>, transform_indices = @transform_3, window_bounds = array<i64: 4, 36>}, {pipeline_mode = #tpu.pipeline_mode<synchronous>, transform_indices = @transform_4, window_bounds = array<i64: 4, 1>}, {pipeline_mode = #tpu.pipeline_mode<synchronous>, transform_indices = @transform_5, window_bounds = array<i64: 2, 256>}, {transform_indices = @transform_6, window_bounds = array<i64: 1, 4, 256>}]} {
    %c0_i32 = arith.constant 0 : i32
    %0 = arith.cmpi eq, %arg0, %c0_i32 : i32
    %1 = arith.extui %0 : i1 to i32
    %c0_i32_0 = arith.constant 0 : i32
    %2 = arith.cmpi ne, %1, %c0_i32_0 : i32
    scf.if %2 {
      %cst_87 = arith.constant 0.000000e+00 : f32
      %103 = vector.broadcast %cst_87 : f32 to vector<4x401xf32>
      %c0_88 = arith.constant 0 : index
      %c0_89 = arith.constant 0 : index
      %104 = vector.load %arg9[%c0_88, %c0_89] : memref<4x401xf32, #tpu.memory_space<vmem>>, vector<4x401xf32>
      tpu.vector_store %arg9[%c0_88, %c0_89], %103 {strides = array<i32>} : memref<4x401xf32, #tpu.memory_space<vmem>>, vector<4x401xf32>,
    } else {
    }
    %c0 = arith.constant 0 : index
    %c0_1 = arith.constant 0 : index
    %3 = vector.load %arg6[%c0, %c0_1] : memref<2x256xf32, #tpu.memory_space<vmem>>, vector<1x256xf32>
    %c1 = arith.constant 1 : index
    %c0_2 = arith.constant 0 : index
    %4 = vector.load %arg6[%c1, %c0_2] : memref<2x256xf32, #tpu.memory_space<vmem>>, vector<1x256xf32>
    %c0_3 = arith.constant 0 : index
    %c0_4 = arith.constant 0 : index
    %c0_5 = arith.constant 0 : index
    %5 = vector.load %arg1[%c0_3, %c0_4, %c0_5] : memref<1x4x290xf32, #tpu.memory_space<vmem>>, vector<1x4x256xf32>
    %6 = vector.shape_cast %5 : vector<1x4x256xf32> to vector<4x256xf32>
    %7 = vector.broadcast %3 : vector<1x256xf32> to vector<4x256xf32>
    %8 = arith.mulf %6, %7 : vector<4x256xf32>
    %c0_6 = arith.constant 0 : index
    %c0_7 = arith.constant 0 : index
    %9 = vector.load %arg8[%c0_6, %c0_7] : memref<36x256xf32, #tpu.memory_space<vmem>>, vector<4x256xf32>
    tpu.vector_store %arg8[%c0_6, %c0_7], %8 {strides = array<i32>} : memref<36x256xf32, #tpu.memory_space<vmem>>, vector<4x256xf32>,
    %c0_8 = arith.constant 0 : index
    %c0_9 = arith.constant 0 : index
    %c1_10 = arith.constant 1 : index
    %10 = vector.load %arg1[%c0_8, %c0_9, %c1_10] : memref<1x4x290xf32, #tpu.memory_space<vmem>>, vector<1x4x256xf32>
    %11 = vector.shape_cast %10 : vector<1x4x256xf32> to vector<4x256xf32>
    %c4 = arith.constant 4 : index
    %c0_11 = arith.constant 0 : index
    %12 = vector.load %arg8[%c4, %c0_11] : memref<36x256xf32, #tpu.memory_space<vmem>>, vector<4x256xf32>
    tpu.vector_store %arg8[%c4, %c0_11], %11 {strides = array<i32>} : memref<36x256xf32, #tpu.memory_space<vmem>>, vector<4x256xf32>,
    %c0_12 = arith.constant 0 : index
    %c0_13 = arith.constant 0 : index
    %c2 = arith.constant 2 : index
    %13 = vector.load %arg1[%c0_12, %c0_13, %c2] : memref<1x4x290xf32, #tpu.memory_space<vmem>>, vector<1x4x256xf32>
    %14 = vector.shape_cast %13 : vector<1x4x256xf32> to vector<4x256xf32>
    %15 = vector.broadcast %4 : vector<1x256xf32> to vector<4x256xf32>
    %16 = arith.mulf %14, %15 : vector<4x256xf32>
    %c8 = arith.constant 8 : index
    %c0_14 = arith.constant 0 : index
    %17 = vector.load %arg8[%c8, %c0_14] : memref<36x256xf32, #tpu.memory_space<vmem>>, vector<4x256xf32>
    tpu.vector_store %arg8[%c8, %c0_14], %16 {strides = array<i32>} : memref<36x256xf32, #tpu.memory_space<vmem>>, vector<4x256xf32>,
    %c0_15 = arith.constant 0 : index
    %c0_16 = arith.constant 0 : index
    %c16 = arith.constant 16 : index
    %18 = vector.load %arg1[%c0_15, %c0_16, %c16] : memref<1x4x290xf32, #tpu.memory_space<vmem>>, vector<1x4x256xf32>
    %19 = vector.shape_cast %18 : vector<1x4x256xf32> to vector<4x256xf32>
    %20 = vector.broadcast %3 : vector<1x256xf32> to vector<4x256xf32>
    %21 = arith.mulf %19, %20 : vector<4x256xf32>
    %c12 = arith.constant 12 : index
    %c0_17 = arith.constant 0 : index
    %22 = vector.load %arg8[%c12, %c0_17] : memref<36x256xf32, #tpu.memory_space<vmem>>, vector<4x256xf32>
    tpu.vector_store %arg8[%c12, %c0_17], %21 {strides = array<i32>} : memref<36x256xf32, #tpu.memory_space<vmem>>, vector<4x256xf32>,
    %c0_18 = arith.constant 0 : index
    %c0_19 = arith.constant 0 : index
    %c17 = arith.constant 17 : index
    %23 = vector.load %arg1[%c0_18, %c0_19, %c17] : memref<1x4x290xf32, #tpu.memory_space<vmem>>, vector<1x4x256xf32>
    %24 = vector.shape_cast %23 : vector<1x4x256xf32> to vector<4x256xf32>
    %c16_20 = arith.constant 16 : index
    %c0_21 = arith.constant 0 : index
    %25 = vector.load %arg8[%c16_20, %c0_21] : memref<36x256xf32, #tpu.memory_space<vmem>>, vector<4x256xf32>
    tpu.vector_store %arg8[%c16_20, %c0_21], %24 {strides = array<i32>} : memref<36x256xf32, #tpu.memory_space<vmem>>, vector<4x256xf32>,
    %c0_22 = arith.constant 0 : index
    %c0_23 = arith.constant 0 : index
    %c18 = arith.constant 18 : index
    %26 = vector.load %arg1[%c0_22, %c0_23, %c18] : memref<1x4x290xf32, #tpu.memory_space<vmem>>, vector<1x4x256xf32>
    %27 = vector.shape_cast %26 : vector<1x4x256xf32> to vector<4x256xf32>
    %28 = vector.broadcast %4 : vector<1x256xf32> to vector<4x256xf32>
    %29 = arith.mulf %27, %28 : vector<4x256xf32>
    %c20 = arith.constant 20 : index
    %c0_24 = arith.constant 0 : index
    %30 = vector.load %arg8[%c20, %c0_24] : memref<36x256xf32, #tpu.memory_space<vmem>>, vector<4x256xf32>
    tpu.vector_store %arg8[%c20, %c0_24], %29 {strides = array<i32>} : memref<36x256xf32, #tpu.memory_space<vmem>>, vector<4x256xf32>,
    %c0_25 = arith.constant 0 : index
    %c0_26 = arith.constant 0 : index
    %c32 = arith.constant 32 : index
    %31 = vector.load %arg1[%c0_25, %c0_26, %c32] : memref<1x4x290xf32, #tpu.memory_space<vmem>>, vector<1x4x256xf32>
    %32 = vector.shape_cast %31 : vector<1x4x256xf32> to vector<4x256xf32>
    %33 = vector.broadcast %3 : vector<1x256xf32> to vector<4x256xf32>
    %34 = arith.mulf %32, %33 : vector<4x256xf32>
    %c24 = arith.constant 24 : index
    %c0_27 = arith.constant 0 : index
    %35 = vector.load %arg8[%c24, %c0_27] : memref<36x256xf32, #tpu.memory_space<vmem>>, vector<4x256xf32>
    tpu.vector_store %arg8[%c24, %c0_27], %34 {strides = array<i32>} : memref<36x256xf32, #tpu.memory_space<vmem>>, vector<4x256xf32>,
    %c0_28 = arith.constant 0 : index
    %c0_29 = arith.constant 0 : index
    %c33 = arith.constant 33 : index
    %36 = vector.load %arg1[%c0_28, %c0_29, %c33] : memref<1x4x290xf32, #tpu.memory_space<vmem>>, vector<1x4x256xf32>
    %37 = vector.shape_cast %36 : vector<1x4x256xf32> to vector<4x256xf32>
    %c28 = arith.constant 28 : index
    %c0_30 = arith.constant 0 : index
    %38 = vector.load %arg8[%c28, %c0_30] : memref<36x256xf32, #tpu.memory_space<vmem>>, vector<4x256xf32>
    tpu.vector_store %arg8[%c28, %c0_30], %37 {strides = array<i32>} : memref<36x256xf32, #tpu.memory_space<vmem>>, vector<4x256xf32>,
    %c0_31 = arith.constant 0 : index
    %c0_32 = arith.constant 0 : index
    %c34 = arith.constant 34 : index
    %39 = vector.load %arg1[%c0_31, %c0_32, %c34] : memref<1x4x290xf32, #tpu.memory_space<vmem>>, vector<1x4x256xf32>
    %40 = vector.shape_cast %39 : vector<1x4x256xf32> to vector<4x256xf32>
    %41 = vector.broadcast %4 : vector<1x256xf32> to vector<4x256xf32>
    %42 = arith.mulf %40, %41 : vector<4x256xf32>
    %c32_33 = arith.constant 32 : index
    %c0_34 = arith.constant 0 : index
    %43 = vector.load %arg8[%c32_33, %c0_34] : memref<36x256xf32, #tpu.memory_space<vmem>>, vector<4x256xf32>
    tpu.vector_store %arg8[%c32_33, %c0_34], %42 {strides = array<i32>} : memref<36x256xf32, #tpu.memory_space<vmem>>, vector<4x256xf32>,
    %c0_35 = arith.constant 0 : index
    %c0_36 = arith.constant 0 : index
    %44 = vector.load %arg2[%c0_35, %c0_36] : memref<4x36xf32, #tpu.memory_space<vmem>>, vector<4x36xf32>
    %c0_37 = arith.constant 0 : index
    %c0_38 = arith.constant 0 : index
    %45 = vector.load %arg8[%c0_37, %c0_38] : memref<36x256xf32, #tpu.memory_space<vmem>>, vector<36x256xf32>
    %cst = arith.constant dense<0.000000e+00> : vector<4x256xf32>
    %46 = tpu.matmul %44, %45, %cst {dimension_numbers = #tpu.dot_dimension_numbers<[1], [0], [0], [1], [0, 0, 1, 1], [], []>} : vector<4x36xf32>, vector<36x256xf32>, vector<4x256xf32> -> vector<4x256xf32>
    %c0_39 = arith.constant 0 : index
    %c0_40 = arith.constant 0 : index
    %47 = vector.load %arg3[%c0_39, %c0_40] : memref<4x1xf32, #tpu.memory_space<vmem>>, vector<4x1xf32>
    %48 = vector.broadcast %47 : vector<4x1xf32> to vector<4x256xf32>
    %49 = arith.addf %46, %48 : vector<4x256xf32>
    %cst_41 = arith.constant 0.000000e+00 : f32
    %50 = vector.broadcast %cst_41 : f32 to vector<4x256xf32>
    %51 = arith.cmpf ogt, %49, %50 : vector<4x256xf32>
    %cst_42 = arith.constant 2.000000e-01 : f32
    %52 = vector.broadcast %cst_42 : f32 to vector<4x256xf32>
    %53 = arith.mulf %52, %49 : vector<4x256xf32>
    %54 = arith.select %51, %49, %53 : vector<4x256xi1>, vector<4x256xf32>
    %c0_43 = arith.constant 0 : index
    %c128 = arith.constant 128 : index
    %55 = vector.load %arg9[%c0_43, %c128] : memref<4x401xf32, #tpu.memory_space<vmem>>, vector<4x256xf32>
    tpu.vector_store %arg9[%c0_43, %c128], %54 {strides = array<i32>} : memref<4x401xf32, #tpu.memory_space<vmem>>, vector<4x256xf32>,
    %c0_44 = arith.constant 0 : index
    %c111 = arith.constant 111 : index
    %56 = vector.load %arg9[%c0_44, %c111] : memref<4x401xf32, #tpu.memory_space<vmem>>, vector<4x256xf32>
    %57 = vector.broadcast %3 : vector<1x256xf32> to vector<4x256xf32>
    %58 = arith.mulf %56, %57 : vector<4x256xf32>
    %c0_45 = arith.constant 0 : index
    %c0_46 = arith.constant 0 : index
    %59 = vector.load %arg8[%c0_45, %c0_46] : memref<36x256xf32, #tpu.memory_space<vmem>>, vector<4x256xf32>
    tpu.vector_store %arg8[%c0_45, %c0_46], %58 {strides = array<i32>} : memref<36x256xf32, #tpu.memory_space<vmem>>, vector<4x256xf32>,
    %c0_47 = arith.constant 0 : index
    %c112 = arith.constant 112 : index
    %60 = vector.load %arg9[%c0_47, %c112] : memref<4x401xf32, #tpu.memory_space<vmem>>, vector<4x256xf32>
    %c4_48 = arith.constant 4 : index
    %c0_49 = arith.constant 0 : index
    %61 = vector.load %arg8[%c4_48, %c0_49] : memref<36x256xf32, #tpu.memory_space<vmem>>, vector<4x256xf32>
    tpu.vector_store %arg8[%c4_48, %c0_49], %60 {strides = array<i32>} : memref<36x256xf32, #tpu.memory_space<vmem>>, vector<4x256xf32>,
    %c0_50 = arith.constant 0 : index
    %c113 = arith.constant 113 : index
    %62 = vector.load %arg9[%c0_50, %c113] : memref<4x401xf32, #tpu.memory_space<vmem>>, vector<4x256xf32>
    %63 = vector.broadcast %4 : vector<1x256xf32> to vector<4x256xf32>
    %64 = arith.mulf %62, %63 : vector<4x256xf32>
    %c8_51 = arith.constant 8 : index
    %c0_52 = arith.constant 0 : index
    %65 = vector.load %arg8[%c8_51, %c0_52] : memref<36x256xf32, #tpu.memory_space<vmem>>, vector<4x256xf32>
    tpu.vector_store %arg8[%c8_51, %c0_52], %64 {strides = array<i32>} : memref<36x256xf32, #tpu.memory_space<vmem>>, vector<4x256xf32>,
    %c0_53 = arith.constant 0 : index
    %c127 = arith.constant 127 : index
    %66 = vector.load %arg9[%c0_53, %c127] : memref<4x401xf32, #tpu.memory_space<vmem>>, vector<4x256xf32>
    %67 = vector.broadcast %3 : vector<1x256xf32> to vector<4x256xf32>
    %68 = arith.mulf %66, %67 : vector<4x256xf32>
    %c12_54 = arith.constant 12 : index
    %c0_55 = arith.constant 0 : index
    %69 = vector.load %arg8[%c12_54, %c0_55] : memref<36x256xf32, #tpu.memory_space<vmem>>, vector<4x256xf32>
    tpu.vector_store %arg8[%c12_54, %c0_55], %68 {strides = array<i32>} : memref<36x256xf32, #tpu.memory_space<vmem>>, vector<4x256xf32>,
    %c0_56 = arith.constant 0 : index
    %c128_57 = arith.constant 128 : index
    %70 = vector.load %arg9[%c0_56, %c128_57] : memref<4x401xf32, #tpu.memory_space<vmem>>, vector<4x256xf32>
    %c16_58 = arith.constant 16 : index
    %c0_59 = arith.constant 0 : index
    %71 = vector.load %arg8[%c16_58, %c0_59] : memref<36x256xf32, #tpu.memory_space<vmem>>, vector<4x256xf32>
    tpu.vector_store %arg8[%c16_58, %c0_59], %70 {strides = array<i32>} : memref<36x256xf32, #tpu.memory_space<vmem>>, vector<4x256xf32>,
    %c0_60 = arith.constant 0 : index
    %c129 = arith.constant 129 : index
    %72 = vector.load %arg9[%c0_60, %c129] : memref<4x401xf32, #tpu.memory_space<vmem>>, vector<4x256xf32>
    %73 = vector.broadcast %4 : vector<1x256xf32> to vector<4x256xf32>
    %74 = arith.mulf %72, %73 : vector<4x256xf32>
    %c20_61 = arith.constant 20 : index
    %c0_62 = arith.constant 0 : index
    %75 = vector.load %arg8[%c20_61, %c0_62] : memref<36x256xf32, #tpu.memory_space<vmem>>, vector<4x256xf32>
    tpu.vector_store %arg8[%c20_61, %c0_62], %74 {strides = array<i32>} : memref<36x256xf32, #tpu.memory_space<vmem>>, vector<4x256xf32>,
    %c0_63 = arith.constant 0 : index
    %c143 = arith.constant 143 : index
    %76 = vector.load %arg9[%c0_63, %c143] : memref<4x401xf32, #tpu.memory_space<vmem>>, vector<4x256xf32>
    %77 = vector.broadcast %3 : vector<1x256xf32> to vector<4x256xf32>
    %78 = arith.mulf %76, %77 : vector<4x256xf32>
    %c24_64 = arith.constant 24 : index
    %c0_65 = arith.constant 0 : index
    %79 = vector.load %arg8[%c24_64, %c0_65] : memref<36x256xf32, #tpu.memory_space<vmem>>, vector<4x256xf32>
    tpu.vector_store %arg8[%c24_64, %c0_65], %78 {strides = array<i32>} : memref<36x256xf32, #tpu.memory_space<vmem>>, vector<4x256xf32>,
    %c0_66 = arith.constant 0 : index
    %c144 = arith.constant 144 : index
    %80 = vector.load %arg9[%c0_66, %c144] : memref<4x401xf32, #tpu.memory_space<vmem>>, vector<4x256xf32>
    %c28_67 = arith.constant 28 : index
    %c0_68 = arith.constant 0 : index
    %81 = vector.load %arg8[%c28_67, %c0_68] : memref<36x256xf32, #tpu.memory_space<vmem>>, vector<4x256xf32>
    tpu.vector_store %arg8[%c28_67, %c0_68], %80 {strides = array<i32>} : memref<36x256xf32, #tpu.memory_space<vmem>>, vector<4x256xf32>,
    %c0_69 = arith.constant 0 : index
    %c145 = arith.constant 145 : index
    %82 = vector.load %arg9[%c0_69, %c145] : memref<4x401xf32, #tpu.memory_space<vmem>>, vector<4x256xf32>
    %83 = vector.broadcast %4 : vector<1x256xf32> to vector<4x256xf32>
    %84 = arith.mulf %82, %83 : vector<4x256xf32>
    %c32_70 = arith.constant 32 : index
    %c0_71 = arith.constant 0 : index
    %85 = vector.load %arg8[%c32_70, %c0_71] : memref<36x256xf32, #tpu.memory_space<vmem>>, vector<4x256xf32>
    tpu.vector_store %arg8[%c32_70, %c0_71], %84 {strides = array<i32>} : memref<36x256xf32, #tpu.memory_space<vmem>>, vector<4x256xf32>,
    %c0_72 = arith.constant 0 : index
    %c0_73 = arith.constant 0 : index
    %86 = vector.load %arg4[%c0_72, %c0_73] : memref<4x36xf32, #tpu.memory_space<vmem>>, vector<4x36xf32>
    %c0_74 = arith.constant 0 : index
    %c0_75 = arith.constant 0 : index
    %87 = vector.load %arg8[%c0_74, %c0_75] : memref<36x256xf32, #tpu.memory_space<vmem>>, vector<36x256xf32>
    %cst_76 = arith.constant dense<0.000000e+00> : vector<4x256xf32>
    %88 = tpu.matmul %86, %87, %cst_76 {dimension_numbers = #tpu.dot_dimension_numbers<[1], [0], [0], [1], [0, 0, 1, 1], [], []>} : vector<4x36xf32>, vector<36x256xf32>, vector<4x256xf32> -> vector<4x256xf32>
    %c0_77 = arith.constant 0 : index
    %c0_78 = arith.constant 0 : index
    %89 = vector.load %arg5[%c0_77, %c0_78] : memref<4x1xf32, #tpu.memory_space<vmem>>, vector<4x1xf32>
    %90 = vector.broadcast %89 : vector<4x1xf32> to vector<4x256xf32>
    %91 = arith.addf %88, %90 : vector<4x256xf32>
    %c0_79 = arith.constant 0 : index
    %c0_80 = arith.constant 0 : index
    %c17_81 = arith.constant 17 : index
    %92 = vector.load %arg1[%c0_79, %c0_80, %c17_81] : memref<1x4x290xf32, #tpu.memory_space<vmem>>, vector<1x4x256xf32>
    %93 = vector.shape_cast %92 : vector<1x4x256xf32> to vector<4x256xf32>
    %94 = arith.addf %91, %93 : vector<4x256xf32>
    %cst_82 = arith.constant 0.000000e+00 : f32
    %95 = vector.broadcast %cst_82 : f32 to vector<4x256xf32>
    %96 = arith.cmpf ogt, %94, %95 : vector<4x256xf32>
    %cst_83 = arith.constant 2.000000e-01 : f32
    %97 = vector.broadcast %cst_83 : f32 to vector<4x256xf32>
    %98 = arith.mulf %97, %94 : vector<4x256xf32>
    %99 = arith.select %96, %94, %98 : vector<4x256xi1>, vector<4x256xf32>
    %c0_84 = arith.constant 0 : index
    %c0_85 = arith.constant 0 : index
    %c0_86 = arith.constant 0 : index
    %100 = vector.load %arg7[%c0_84, %c0_85, %c0_86] : memref<1x4x256xf32, #tpu.memory_space<vmem>>, vector<1x4x256xf32>
    %101 = vector.shape_cast %100 : vector<1x4x256xf32> to vector<4x256xf32>
    %102 = vector.shape_cast %99 : vector<4x256xf32> to vector<1x4x256xf32>
    tpu.vector_store %arg7[%c0_84, %c0_85, %c0_86], %102 {strides = array<i32>} : memref<1x4x256xf32, #tpu.memory_space<vmem>>, vector<1x4x256xf32>,
    return
  }
  func.func @transform_0(%arg0: i32) -> (i32, i32, i32) {
    %c0_i32 = arith.constant 0 : i32
    %c0_i32_0 = arith.constant 0 : i32
    %c0_i32_1 = arith.constant 0 : i32
    return %arg0, %c0_i32, %c0_i32_0 : i32, i32, i32
  }
  func.func @transform_1(%arg0: i32) -> (i32, i32) {
    %c0_i32 = arith.constant 0 : i32
    %c0_i32_0 = arith.constant 0 : i32
    %c0_i32_1 = arith.constant 0 : i32
    return %c0_i32, %c0_i32_0 : i32, i32
  }
  func.func @transform_2(%arg0: i32) -> (i32, i32) {
    %c0_i32 = arith.constant 0 : i32
    %c0_i32_0 = arith.constant 0 : i32
    %c0_i32_1 = arith.constant 0 : i32
    return %c0_i32, %c0_i32_0 : i32, i32
  }
  func.func @transform_3(%arg0: i32) -> (i32, i32) {
    %c0_i32 = arith.constant 0 : i32
    %c0_i32_0 = arith.constant 0 : i32
    %c0_i32_1 = arith.constant 0 : i32
    return %c0_i32, %c0_i32_0 : i32, i32
  }
  func.func @transform_4(%arg0: i32) -> (i32, i32) {
    %c0_i32 = arith.constant 0 : i32
    %c0_i32_0 = arith.constant 0 : i32
    %c0_i32_1 = arith.constant 0 : i32
    return %c0_i32, %c0_i32_0 : i32, i32
  }
  func.func @transform_5(%arg0: i32) -> (i32, i32) {
    %c0_i32 = arith.constant 0 : i32
    %c0_i32_0 = arith.constant 0 : i32
    %c0_i32_1 = arith.constant 0 : i32
    return %c0_i32, %c0_i32_0 : i32, i32
  }
  func.func @transform_6(%arg0: i32) -> (i32, i32, i32) {
    %c0_i32 = arith.constant 0 : i32
    %c0_i32_0 = arith.constant 0 : i32
    %c0_i32_1 = arith.constant 0 : i32
    return %arg0, %c0_i32, %c0_i32_0 : i32, i32, i32
  }
}

</mosaic_0001>

<llo_original>
// kernel: dis_resblock_forward.1
$region0: #{dis_resblock_forward.1}
  #allocation0 [shape = 'u32[]', space=smem, size = 0x4, offset = 0x4, fixed_abs, tag = 'smem constant byte address 0x4 - core index']
  #allocation1 [shape = 'u32[144,128]{1,0:T(1,128)}', space=vmem, size = 0x12000, scoped, tag = 'internal scratch']
  #allocation2 [shape = 'f32[36,256]{1,0:T(8,128)}', space=vmem, size = 0xa000, scoped, tag = 'scratch operand']
  #allocation3 [shape = 'f32[4,401]{1,0:T(4,128)}', space=vmem, size = 0x2000, scoped, tag = 'scratch operand']
  %s0 = inlined_call_operand.vmem [shape: f32[2,4,290], index: 0, kind: input, shape index: {}]
  %s1 = inlined_call_operand.vmem [shape: f32[4,36], index: 1, kind: input, shape index: {}]
  %s2 = inlined_call_operand.vmem [shape: f32[4,1], index: 2, kind: input, shape index: {}]
  %s3 = inlined_call_operand.vmem [shape: f32[4,36], index: 3, kind: input, shape index: {}]
  %s4 = inlined_call_operand.vmem [shape: f32[4,1], index: 4, kind: input, shape index: {}]
  %s5 = inlined_call_operand.vmem [shape: f32[2,256], index: 5, kind: input, shape index: {}]
  %s6 = inlined_call_operand.vmem [shape: f32[2,4,256], index: 6, kind: output, shape index: {}]
  %s7 = sld [smem:[#allocation0]]
  $region61: #{dis_resblock_forward.1} parent=0
    _
  %s9 = ssub.s32 1, %s7
  %s10 = scalar_select 0, %s9, %s7
  loop: start=0, step=1, limit=4
  $region2: #{dis_resblock_forward.1} parent=0 // loop_pre_header
    _
  $region3: #{dis_resblock_forward.1} parent=0 // loop_header
    %s12 = sphi 0, %s16
    %p13 = scmp.ge.s32.totalorder %s12, 4
    %s22 = sphi 0, %s24
    %s25 = sphi 0, %s22
    %s26 = sphi 0, %s25
    %s42 = sphi 0, %s26
    %s46 = sphi 0, %s46
    %s48 = sphi 0, %s46
    %s49 = sphi 0, %s48
    %s63 = sphi 0, %s49
    %s67 = sphi 0, %s67
    %s69 = sphi 0, %s67
    %s70 = sphi 0, %s69
    %s84 = sphi 0, %s70
    %s88 = sphi 0, %s88
    %s90 = sphi 0, %s88
    %s91 = sphi 0, %s90
    %s105 = sphi 0, %s91
    %s109 = sphi 0, %s109
    %s111 = sphi 0, %s109
    %s112 = sphi 0, %s111
    %s126 = sphi 0, %s112
    %s130 = sphi 0, %s130
    %s132 = sphi 0, %s130
    %s133 = sphi 0, %s132
    %s147 = sphi 0, %s133
    %s153 = sphi 0, %s155
    %s156 = sphi 0, %s153
    %s157 = sphi 0, %s156
    %s173 = sphi 0, %s157
  $region4: #{dis_resblock_forward.1} parent=0 // loop_header_branch
    %15 = sbr.rel (%p13) target = $region8
  $region5: #{dis_resblock_forward.1} parent=0 // loop_body
    %s17 = ssub.s32 %s12, 1
    %s18 = ssub.s32 %s12, 2
    %s19 = sadd.s32 %s12, 1
    %s20 = ssub.s32 %s12, %s19
    %p21 = scmp.eq.s32.totalorder %s20, 0
    %s23 = sadd.s32 %s22, 1
    %s24 = scalar_select %p21, %s22, %s23
    %p27 = pneg %p21
    %p28 = scmp.eq.s32.totalorder %s12, 1
    %p29 = por %p27, %p28
    %p30 = scmp.ne.s32.totalorder %s22, %s25
    %p31 = scmp.eq.s32.totalorder %s12, 0
    %p32 = por %p30, %p31
    %p33 = scmp.ne.s32.totalorder %s22, %s25
    %p34 = scmp.eq.s32.totalorder %s17, 1
    %p35 = por %p33, %p34
    %p36 = scmp.ne.s32.totalorder %s25, %s26
    %p37 = scmp.eq.s32.totalorder %s17, 0
    %p38 = por %p36, %p37
    %p39 = scmp.ne.s32.totalorder %s25, %s26
    %p40 = scmp.eq.s32.totalorder %s18, 1
    %p41 = por %p39, %p40
    %p43 = scmp.ne.s32.totalorder %s26, %s42
    %p44 = scmp.eq.s32.totalorder %s18, 0
    %p45 = por %p43, %p44
    %s47 = sadd.s32 %s46, 1
    %p50 = scmp.eq.s32.totalorder %s12, 1
    %p51 = scmp.ne.s32.totalorder %s46, %s48
    %p52 = scmp.eq.s32.totalorder %s12, 0
    %p53 = por %p51, %p52
    %p54 = scmp.ne.s32.totalorder %s46, %s48
    %p55 = scmp.eq.s32.totalorder %s17, 1
    %p56 = por %p54, %p55
    %p57 = scmp.ne.s32.totalorder %s48, %s49
    %p58 = scmp.eq.s32.totalorder %s17, 0
    %p59 = por %p57, %p58
    %p60 = scmp.ne.s32.totalorder %s48, %s49
    %p61 = scmp.eq.s32.totalorder %s18, 1
    %p62 = por %p60, %p61
    %p64 = scmp.ne.s32.totalorder %s49, %s63
    %p65 = scmp.eq.s32.totalorder %s18, 0
    %p66 = por %p64, %p65
    %s68 = sadd.s32 %s67, 1
    %p71 = scmp.eq.s32.totalorder %s12, 1
    %p72 = scmp.ne.s32.totalorder %s67, %s69
    %p73 = scmp.eq.s32.totalorder %s12, 0
    %p74 = por %p72, %p73
    %p75 = scmp.ne.s32.totalorder %s67, %s69
    %p76 = scmp.eq.s32.totalorder %s17, 1
    %p77 = por %p75, %p76
    %p78 = scmp.ne.s32.totalorder %s69, %s70
    %p79 = scmp.eq.s32.totalorder %s17, 0
    %p80 = por %p78, %p79
    %p81 = scmp.ne.s32.totalorder %s69, %s70
    %p82 = scmp.eq.s32.totalorder %s18, 1
    %p83 = por %p81, %p82
    %p85 = scmp.ne.s32.totalorder %s70, %s84
    %p86 = scmp.eq.s32.totalorder %s18, 0
    %p87 = por %p85, %p86
    %s89 = sadd.s32 %s88, 1
    %p92 = scmp.eq.s32.totalorder %s12, 1
    %p93 = scmp.ne.s32.totalorder %s88, %s90
    %p94 = scmp.eq.s32.totalorder %s12, 0
    %p95 = por %p93, %p94
    %p96 = scmp.ne.s32.totalorder %s88, %s90
    %p97 = scmp.eq.s32.totalorder %s17, 1
    %p98 = por %p96, %p97
    %p99 = scmp.ne.s32.totalorder %s90, %s91
    %p100 = scmp.eq.s32.totalorder %s17, 0
    %p101 = por %p99, %p100
    %p102 = scmp.ne.s32.totalorder %s90, %s91
    %p103 = scmp.eq.s32.totalorder %s18, 1
    %p104 = por %p102, %p103
    %p106 = scmp.ne.s32.totalorder %s91, %s105
    %p107 = scmp.eq.s32.totalorder %s18, 0
    %p108 = por %p106, %p107
    %s110 = sadd.s32 %s109, 1
    %p113 = scmp.eq.s32.totalorder %s12, 1
    %p114 = scmp.ne.s32.totalorder %s109, %s111
    %p115 = scmp.eq.s32.totalorder %s12, 0
    %p116 = por %p114, %p115
    %p117 = scmp.ne.s32.totalorder %s109, %s111
    %p118 = scmp.eq.s32.totalorder %s17, 1
    %p119 = por %p117, %p118
    %p120 = scmp.ne.s32.totalorder %s111, %s112
    %p121 = scmp.eq.s32.totalorder %s17, 0
    %p122 = por %p120, %p121
    %p123 = scmp.ne.s32.totalorder %s111, %s112
    %p124 = scmp.eq.s32.totalorder %s18, 1
    %p125 = por %p123, %p124
    %p127 = scmp.ne.s32.totalorder %s112, %s126
    %p128 = scmp.eq.s32.totalorder %s18, 0
    %p129 = por %p127, %p128
    %s131 = sadd.s32 %s130, 1
    %p134 = scmp.eq.s32.totalorder %s12, 1
    %p135 = scmp.ne.s32.totalorder %s130, %s132
    %p136 = scmp.eq.s32.totalorder %s12, 0
    %p137 = por %p135, %p136
    %p138 = scmp.ne.s32.totalorder %s130, %s132
    %p139 = scmp.eq.s32.totalorder %s17, 1
    %p140 = por %p138, %p139
    %p141 = scmp.ne.s32.totalorder %s132, %s133
    %p142 = scmp.eq.s32.totalorder %s17, 0
    %p143 = por %p141, %p142
    %p144 = scmp.ne.s32.totalorder %s132, %s133
    %p145 = scmp.eq.s32.totalorder %s18, 1
    %p146 = por %p144, %p145
    %p148 = scmp.ne.s32.totalorder %s133, %s147
    %p149 = scmp.eq.s32.totalorder %s18, 0
    %p150 = por %p148, %p149
    %s151 = ssub.s32 %s12, %s19
    %p152 = scmp.eq.s32.totalorder %s151, 0
    %s154 = sadd.s32 %s153, 1
    %s155 = scalar_select %p152, %s153, %s154
    %p158 = pneg %p152
    %p159 = scmp.eq.s32.totalorder %s12, 1
    %p160 = por %p158, %p159
    %p161 = scmp.ne.s32.totalorder %s153, %s156
    %p162 = scmp.eq.s32.totalorder %s12, 0
    %p163 = por %p161, %p162
    %p164 = scmp.ne.s32.totalorder %s153, %s156
    %p165 = scmp.eq.s32.totalorder %s17, 1
    %p166 = por %p164, %p165
    %p167 = scmp.ne.s32.totalorder %s156, %s157
    %p168 = scmp.eq.s32.totalorder %s17, 0
    %p169 = por %p167, %p168
    %p170 = scmp.ne.s32.totalorder %s156, %s157
    %p171 = scmp.eq.s32.totalorder %s18, 1
    %p172 = por %p170, %p171
    %p174 = scmp.ne.s32.totalorder %s157, %s173
    %p175 = scmp.eq.s32.totalorder %s18, 0
    %p176 = por %p174, %p175
    %p177 = scmp.le.s32.totalorder 1, %s12
    %p178 = scmp.lt.s32.totalorder %s12, 3
    %p179 = pnand %p177, %p178
    %p180 = pneg %p179
    // Predicated region
    $region9: #{dis_resblock_forward.1} parent=5 // pred_check
      _
    $region10: #{dis_resblock_forward.1} parent=5 // pred_check_branch
      %182 = sbr.rel (%p179) target = $region12
    $region11: #{dis_resblock_forward.1} parent=5 // pred_region
      %s183 = ssub.s32 %s12, 1
      // Predicated region
      $region13: #{dis_resblock_forward.1} parent=11 // pred_check
        %p184 = pneg %p59
      $region14: #{dis_resblock_forward.1} parent=11 // pred_check_branch
        %186 = sbr.rel (%p184) target = $region16
      $region15: #{dis_resblock_forward.1} parent=11 // pred_region
        _
      $region16: #{dis_resblock_forward.1} parent=11 // pred_fallthru
        _
      // Predicated region
      $region17: #{dis_resblock_forward.1} parent=11 // pred_check
        %p187 = pneg %p80
      $region18: #{dis_resblock_forward.1} parent=11 // pred_check_branch
        %189 = sbr.rel (%p187) target = $region20
      $region19: #{dis_resblock_forward.1} parent=11 // pred_region
        _
      $region20: #{dis_resblock_forward.1} parent=11 // pred_fallthru
        _
      // Predicated region
      $region21: #{dis_resblock_forward.1} parent=11 // pred_check
        %p190 = pneg %p101
      $region22: #{dis_resblock_forward.1} parent=11 // pred_check_branch
        %192 = sbr.rel (%p190) target = $region24
      $region23: #{dis_resblock_forward.1} parent=11 // pred_region
        _
      $region24: #{dis_resblock_forward.1} parent=11 // pred_fallthru
        _
      // Predicated region
      $region25: #{dis_resblock_forward.1} parent=11 // pred_check
        %p193 = pneg %p122
      $region26: #{dis_resblock_forward.1} parent=11 // pred_check_branch
        %195 = sbr.rel (%p193) target = $region28
      $region27: #{dis_resblock_forward.1} parent=11 // pred_region
        _
      $region28: #{dis_resblock_forward.1} parent=11 // pred_fallthru
        _
      // Predicated region
      $region29: #{dis_resblock_forward.1} parent=11 // pred_check
        %p196 = pneg %p143
      $region30: #{dis_resblock_forward.1} parent=11 // pred_check_branch
        %198 = sbr.rel (%p196) target = $region32
      $region31: #{dis_resblock_forward.1} parent=11 // pred_region
        _
      $region32: #{dis_resblock_forward.1} parent=11 // pred_fallthru
        _
    $region12: #{dis_resblock_forward.1} parent=5 // pred_fallthru
      _
    %p199 = scmp.lt.s32.totalorder %s12, 2
    // Predicated region
    $region33: #{dis_resblock_forward.1} parent=5 // pred_check
      %p200 = pneg %p199
    $region34: #{dis_resblock_forward.1} parent=5 // pred_check_branch
      %202 = sbr.rel (%p200) target = $region36
    $region35: #{dis_resblock_forward.1} parent=5 // pred_region
      // Predicated region
      $region37: #{dis_resblock_forward.1} parent=35 // pred_check
        %p203 = pneg %p32
      $region38: #{dis_resblock_forward.1} parent=35 // pred_check_branch
        %205 = sbr.rel (%p203) target = $region40
      $region39: #{dis_resblock_forward.1} parent=35 // pred_region
        %p206 = scmp.lt.s32.totalorder %s12, 1
        %s207 = scalar_select %p206, %s12, 1
        %s208 = smul.addr %s207, 3
        %s209 = smul.addr %s208, 4
        %s210 = scalar_lea.vmem %s0, %s209
      $region40: #{dis_resblock_forward.1} parent=35 // pred_fallthru
        _
    $region36: #{dis_resblock_forward.1} parent=5 // pred_fallthru
      _
    %p211 = scmp.le.s32.totalorder 1, %s12
    %p212 = scmp.lt.s32.totalorder %s12, 3
    %p213 = pnand %p211, %p212
    %p214 = pneg %p213
    // Predicated region
    $region41: #{dis_resblock_forward.1} parent=5 // pred_check
      _
    $region42: #{dis_resblock_forward.1} parent=5 // pred_check_branch
      %216 = sbr.rel (%p213) target = $region44
    $region43: #{dis_resblock_forward.1} parent=5 // pred_region
      %s217 = ssub.s32 %s12, 1
      %p218 = scmp.lt.s32.totalorder %s17, 1
      %s219 = scalar_select %p218, %s17, 1
      %s220 = smul.addr %s219, 3
      %s221 = smul.addr %s220, 4
      %s222 = scalar_lea.vmem %s0, %s221
      %p223 = pneg %p38
      %p224 = pneg %p35
      %p225 = pneg %p59
      %p226 = pneg %p56
      %p227 = pneg %p80
      %p228 = pneg %p77
      %p229 = pneg %p101
      %p230 = pneg %p98
      %p231 = pneg %p122
      %p232 = pneg %p119
      %p233 = pneg %p143
      %p234 = pneg %p140
      %p235 = pneg %p169
      %p236 = pneg %p166
      %p237 = scmp.lt.s32.totalorder %s17, 1
      %s238 = scalar_select %p237, %s17, 1
      %s239 = smul.addr %s238, 2
      %s240 = smul.addr %s239, 4
      %s241 = scalar_lea.vmem %s6, %s240
      %p242 = scmp.lt.s32.totalorder %s17, 1
      %s243 = scalar_select %p242, %s17, 1
      %s244 = smul.addr %s243, 3
      %s245 = smul.addr %s244, 4
      %s246 = scalar_lea.vmem %s0, %s245
      %p247 = scmp.lt.s32.totalorder %s17, 1
      %s248 = scalar_select %p247, %s17, 1
      %s249 = smul.addr %s248, 2
      %s250 = smul.addr %s249, 4
      %s251 = scalar_lea.vmem %s6, %s250
      %p252 = scmp.eq.s32.totalorder %s17, 0
      // Predicated region
      $region45: #{dis_resblock_forward.1} parent=43 // pred_check
        %p253 = pneg %p252
      $region46: #{dis_resblock_forward.1} parent=43 // pred_check_branch
        %255 = sbr.rel (%p253) target = $region48
      $region47: #{dis_resblock_forward.1} parent=43 // pred_region
        %256 = vst [vmem:[#allocation3] sm:$0xff] 0.0
        %vm257 = vcmask 1043456
        %vm258 = vcmask 138244
        %vm259 = vmor %vm258, %vm257
        %260 = vst.msk [vmem:[#allocation3 + $0x8] sm:$0xff] %vm259, 0.0
      $region48: #{dis_resblock_forward.1} parent=43 // pred_fallthru
        _
      %v261 = vld [vmem:[%s5] ss:$2 sm:$0x3]
      %s262 = scalar_lea.vmem %s5, 1
      %v263 = vld [vmem:[%s262] ss:$2 sm:$0x3]
      %v264 = vld [vmem:[%s246] sm:$0xff]
      %v266 = vlaneseq
      %v267 = vshrl.u32 %v266, 7
      %v268 = vsub.s32 0, %v267
      %v269 = vrot.slane %v261, %v268
      %v270 = vlaneseq
      %v271 = vshrl.u32 %v270, 7
      %v272 = vsub.s32 1, %v271
      %v273 = vrot.slane %v261, %v272
      %v274 = vcombine.low %v269, %v273
      %v276 = vmul.f32 %v264, %v274
      %v278 = vcombine.high %v276, %v276
      %280 = vst [vmem:[#allocation2] sm:$0xf] %v276
      %281 = vst [vmem:[#allocation2 + $0x8] sm:$0xf] %v278
      %v282 = vld [vmem:[%s246] sm:$0xff]
      %v283 = vld [vmem:[%s246 + $0x8] sm:$0xf]
      %v286 = vcombine.low %v282, %v282
      %v287 = vcombine.low %v283, %v283
      %288 = vrot.lane.b32.xlu0 %v286, 127
      %v289 = vpop.permute.xlu0 %288
      %290 = vrot.lane.b32.xlu0 %v282, 127
      %v291 = vpop.permute.xlu0 %290
      %292 = vrot.lane.b32.xlu0 %v287, 127
      %v293 = vpop.permute.xlu0 %292
      %vm294 = vcmask 1039360
      %v295 = vsel %vm294, %v289, %v291
      %v296 = vsel %vm294, %v291, %v293
      %299 = vst [vmem:[#allocation2] sm:$0xf0] %v295
      %300 = vst [vmem:[#allocation2 + $0x8] sm:$0xf0] %v296
      %v301 = vld [vmem:[%s246] sm:$0xff]
      %v302 = vld [vmem:[%s246 + $0x8] sm:$0xf]
      %v304 = vlaneseq
      %v305 = vshrl.u32 %v304, 7
      %v306 = vsub.s32 0, %v305
      %v307 = vrot.slane %v263, %v306
      %v308 = vlaneseq
      %v309 = vshrl.u32 %v308, 7
      %v310 = vsub.s32 1, %v309
      %v311 = vrot.slane %v263, %v310
      %v312 = vcombine.low %v307, %v311
      %313 = vrot.lane.b32.xlu0 %v312, 2
      %v314 = vpop.permute.xlu0 %313
      %v315 = vrot.slane %v314, 4
      %vm316 = vcmask 15360
      %v317 = vsel %vm316, %v315, %v314
      %v320 = vmul.f32 %v301, %v317
      %v321 = vmul.f32 %v302, %v315
      %v324 = vcombine.high %v320, %v320
      %325 = vrot.lane.b32.xlu0 %v320, 126
      %v326 = vpop.permute.xlu0 %325
      %327 = vrot.lane.b32.xlu0 %v324, 126
      %v328 = vpop.permute.xlu0 %327
      %329 = vrot.lane.b32.xlu0 %v321, 126
      %v330 = vpop.permute.xlu0 %329
      %vm331 = vcmask 1031168
      %v332 = vsel %vm331, %v326, %v328
      %v333 = vsel %vm331, %v328, %v330
      %336 = vst [vmem:[#allocation2 + $0x10] sm:$0xf] %v332
      %337 = vst [vmem:[#allocation2 + $0x18] sm:$0xf] %v333
      %v338 = vld [vmem:[%s246] sm:$0xff]
      %v339 = vld [vmem:[%s246 + $0x8] sm:$0xf]
      %340 = vrot.lane.b32.xlu0 %v274, 16
      %v341 = vpop.permute.xlu0 %340
      %v342 = vrot.slane %v341, 4
      %vm343 = vcmask 130048
      %v344 = vsel %vm343, %v342, %v341
      %v347 = vmul.f32 %v338, %v344
      %v348 = vmul.f32 %v339, %v342
      %v351 = vcombine.low %v347, %v347
      %v352 = vcombine.low %v348, %v348
      %353 = vrot.lane.b32.xlu0 %v351, 112
      %v354 = vpop.permute.xlu0 %353
      %355 = vrot.lane.b32.xlu0 %v347, 112
      %v356 = vpop.permute.xlu0 %355
      %357 = vrot.lane.b32.xlu0 %v352, 112
      %v358 = vpop.permute.xlu0 %357
      %vm359 = vcmask 916480
      %v360 = vsel %vm359, %v354, %v356
      %v361 = vsel %vm359, %v356, %v358
      %364 = vst [vmem:[#allocation2 + $0x10] sm:$0xf0] %v360
      %365 = vst [vmem:[#allocation2 + $0x18] sm:$0xf0] %v361
      %v366 = vld [vmem:[%s246] sm:$0xff]
      %v367 = vld [vmem:[%s246 + $0x8] sm:$0xf]
      %v370 = vcombine.high %v366, %v366
      %371 = vrot.lane.b32.xlu0 %v366, 111
      %v372 = vpop.permute.xlu0 %371
      %373 = vrot.lane.b32.xlu0 %v370, 111
      %v374 = vpop.permute.xlu0 %373
      %375 = vrot.lane.b32.xlu0 %v367, 111
      %v376 = vpop.permute.xlu0 %375
      %vm377 = vcmask 908288
      %v378 = vsel %vm377, %v372, %v374
      %v379 = vsel %vm377, %v374, %v376
      %382 = vst [vmem:[#allocation2 + $0x20] sm:$0xf] %v378
      %383 = vst [vmem:[#allocation2 + $0x28] sm:$0xf] %v379
      %v384 = vld [vmem:[%s246] sm:$0xff]
      %v385 = vld [vmem:[%s246 + $0x8] sm:$0xf]
      %386 = vrot.lane.b32.xlu0 %v312, 18
      %v387 = vpop.permute.xlu0 %386
      %v388 = vrot.slane %v387, 4
      %vm389 = vcmask 146432
      %v390 = vsel %vm389, %v388, %v387
      %v393 = vmul.f32 %v384, %v390
      %v394 = vmul.f32 %v385, %v388
      %v397 = vcombine.low %v393, %v393
      %v398 = vcombine.low %v394, %v394
      %399 = vrot.lane.b32.xlu0 %v397, 110
      %v400 = vpop.permute.xlu0 %399
      %401 = vrot.lane.b32.xlu0 %v393, 110
      %v402 = vpop.permute.xlu0 %401
      %403 = vrot.lane.b32.xlu0 %v398, 110
      %v404 = vpop.permute.xlu0 %403
      %vm405 = vcmask 900096
      %v406 = vsel %vm405, %v400, %v402
      %v407 = vsel %vm405, %v402, %v404
      %410 = vst [vmem:[#allocation2 + $0x20] sm:$0xf0] %v406
      %411 = vst [vmem:[#allocation2 + $0x28] sm:$0xf0] %v407
      %v412 = vld [vmem:[%s246] sm:$0xff]
      %v413 = vld [vmem:[%s246 + $0x8] sm:$0xf]
      %414 = vrot.lane.b32.xlu0 %v274, 32
      %v415 = vpop.permute.xlu0 %414
      %v416 = vrot.slane %v415, 4
      %vm417 = vcmask 261120
      %v418 = vsel %vm417, %v416, %v415
      %v421 = vmul.f32 %v412, %v418
      %v422 = vmul.f32 %v413, %v416
      %v425 = vcombine.high %v421, %v421
      %426 = vrot.lane.b32.xlu0 %v421, 96
      %v427 = vpop.permute.xlu0 %426
      %428 = vrot.lane.b32.xlu0 %v425, 96
      %v429 = vpop.permute.xlu0 %428
      %430 = vrot.lane.b32.xlu0 %v422, 96
      %v431 = vpop.permute.xlu0 %430
      %vm432 = vcmask 785408
      %v433 = vsel %vm432, %v427, %v429
      %v434 = vsel %vm432, %v429, %v431
      %437 = vst [vmem:[#allocation2 + $0x30] sm:$0xf] %v433
      %438 = vst [vmem:[#allocation2 + $0x38] sm:$0xf] %v434
      %v439 = vld [vmem:[%s246] sm:$0xff]
      %v440 = vld [vmem:[%s246 + $0x8] sm:$0xf]
      %v443 = vcombine.low %v439, %v439
      %v444 = vcombine.low %v440, %v440
      %445 = vrot.lane.b32.xlu0 %v443, 95
      %v446 = vpop.permute.xlu0 %445
      %447 = vrot.lane.b32.xlu0 %v439, 95
      %v448 = vpop.permute.xlu0 %447
      %449 = vrot.lane.b32.xlu0 %v444, 95
      %v450 = vpop.permute.xlu0 %449
      %vm451 = vcmask 777216
      %v452 = vsel %vm451, %v446, %v448
      %v453 = vsel %vm451, %v448, %v450
      %456 = vst [vmem:[#allocation2 + $0x30] sm:$0xf0] %v452
      %457 = vst [vmem:[#allocation2 + $0x38] sm:$0xf0] %v453
      %v458 = vld [vmem:[%s246] sm:$0xff]
      %v459 = vld [vmem:[%s246 + $0x8] sm:$0xf]
      %460 = vrot.lane.b32.xlu0 %v312, 34
      %v461 = vpop.permute.xlu0 %460
      %v462 = vrot.slane %v461, 4
      %vm463 = vcmask 277504
      %v464 = vsel %vm463, %v462, %v461
      %v467 = vmul.f32 %v458, %v464
      %v468 = vmul.f32 %v459, %v462
      %v471 = vcombine.high %v467, %v467
      %472 = vrot.lane.b32.xlu0 %v467, 94
      %v473 = vpop.permute.xlu0 %472
      %474 = vrot.lane.b32.xlu0 %v471, 94
      %v475 = vpop.permute.xlu0 %474
      %476 = vrot.lane.b32.xlu0 %v468, 94
      %v477 = vpop.permute.xlu0 %476
      %vm478 = vcmask 769024
      %v479 = vsel %vm478, %v473, %v475
      %v480 = vsel %vm478, %v475, %v477
      %483 = vst [vmem:[#allocation2 + $0x40] sm:$0xf] %v479
      %484 = vst [vmem:[#allocation2 + $0x48] sm:$0xf] %v480
      %v485 = vld [vmem:[%s1] sm:$0xf]
      %v486 = vld [vmem:[#allocation2] sm:$0xff]
      %v487 = vld [vmem:[#allocation2 + $0x8] sm:$0xff]
      %v488 = vld [vmem:[#allocation2 + $0x10] sm:$0xff]
      %v489 = vld [vmem:[#allocation2 + $0x18] sm:$0xff]
      %v490 = vld [vmem:[#allocation2 + $0x20] sm:$0xff]
      %v491 = vld [vmem:[#allocation2 + $0x28] sm:$0xff]
      %v492 = vld [vmem:[#allocation2 + $0x30] sm:$0xff]
      %v493 = vld [vmem:[#allocation2 + $0x38] sm:$0xff]
      %v494 = vld [vmem:[#allocation2 + $0x40] sm:$0xf]
      %v495 = vld [vmem:[#allocation2 + $0x48] sm:$0xf]
      %v496 = vld [vmem:[%s2] sm:$0xf]
      %498 = vset.pattern.permute.xlu0 0
      %499 = vperm.xlu0 %498, %v496
      %v500 = vpop.permute.xlu0 %499
      %vm502 = vcmask 293888
      %v504 = vsel %vm502, %v485, 0
      %vm506 = vcmask 1043456
      %v508 = vsel %vm506, %v494, 0
      %v511 = vsel %vm506, %v495, 0
      %513 = vmatprep.subr.mxu0 0.0
      %514 = vmatpush1.msra.mxu0 0.0
      %515 = vmatprep.subr.mxu0 0.0
      %516 = vmatpush1.msra.mxu0 0.0
      %517 = vmatprep.subr.mxu0 0.0
      %518 = vmatpush1.msra.mxu0 0.0
      %519 = vmatprep.subr.mxu0 0.0
      %520 = vmatpush1.msra.mxu0 0.0
      %521 = vmatprep.subr.mxu0 0.0
      %522 = vmatpush1.msra.mxu0 0.0
      %523 = vmatprep.subr.mxu0 0.0
      %524 = vmatpush1.msra.mxu0 0.0
      %525 = vmatprep.subr.mxu0 0.0
      %526 = vmatpush1.msra.mxu0 0.0
      %527 = vmatprep.subr.mxu0 0.0
      %528 = vmatpush1.msra.mxu0 0.0
      %529 = vmatprep.subr.mxu0 0.0
      %530 = vmatpush1.msra.mxu0 0.0
      %531 = vmatprep.subr.mxu0 0.0
      %532 = vmatpush1.msra.mxu0 0.0
      %533 = vmatprep.subr.mxu0 0.0
      %534 = vmatpush1.msra.mxu0 0.0
      %535 = vmatprep.subr.mxu0 %v511
      %536 = vmatpush1.msra.mxu0 %v508
      %537 = vmatprep.subr.mxu0 %v493
      %538 = vmatpush1.msra.mxu0 %v492
      %539 = vmatprep.subr.mxu0 %v491
      %540 = vmatpush1.msra.mxu0 %v490
      %541 = vmatprep.subr.mxu0 %v489
      %542 = vmatpush1.msra.mxu0 %v488
      %543 = vmatprep.subr.mxu0 %v487
      %544 = vmatpush1.msra.mxu0 %v486
      %545 = vmatprep.subr.mxu0 0.0
      %546 = vmatpush2.msra.mxu0 0.0
      %547 = vmatprep.subr.mxu0 0.0
      %548 = vmatpush2.msra.mxu0 0.0
      %549 = vmatprep.subr.mxu0 0.0
      %550 = vmatpush2.msra.mxu0 0.0
      %551 = vmatprep.subr.mxu0 0.0
      %552 = vmatpush2.msra.mxu0 0.0
      %553 = vmatprep.subr.mxu0 0.0
      %554 = vmatpush2.msra.mxu0 0.0
      %555 = vmatprep.subr.mxu0 0.0
      %556 = vmatpush2.msra.mxu0 0.0
      %557 = vmatprep.subr.mxu0 0.0
      %558 = vmatpush2.msra.mxu0 0.0
      %559 = vmatprep.subr.mxu0 0.0
      %560 = vmatpush2.msra.mxu0 0.0
      %561 = vmatprep.subr.mxu0 0.0
      %562 = vmatpush2.msra.mxu0 0.0
      %563 = vmatprep.subr.mxu0 0.0
      %564 = vmatpush2.msra.mxu0 0.0
      %565 = vmatprep.subr.mxu0 0.0
      %566 = vmatpush2.msra.mxu0 0.0
      %567 = vmatprep.subr.mxu0 0.0
      %568 = vmatpush2.msra.mxu0 0.0
      %569 = vmatprep.subr.mxu0 0.0
      %570 = vmatpush2.msra.mxu0 0.0
      %571 = vmatprep.subr.mxu0 0.0
      %572 = vmatpush2.msra.mxu0 0.0
      %573 = vmatprep.subr.mxu0 0.0
      %574 = vmatpush2.msra.mxu0 0.0
      %575 = vmatprep.subr.mxu0 0.0
      %576 = vmatpush2.msra.mxu0 0.0
      %577 = vmatprep.mubr.f32.mxu0 0.0
      %578 = vmatmul.mubr.f32.gmra.mxu0 %v504
      %v579 = vpop.f32.mrf.mxu0
      %v580 = vadd.f32 %v500, %v579
      %v581 = vpop.f32.mrf.mxu0
      %v582 = vadd.f32 %v500, %v581
      %583 = vdwg.mxu0
      %vm584 = vcmp.gt.f32.partialorder %v580, 0.0
      %vm585 = vcmp.gt.f32.partialorder %v582, 0.0
      %v586 = vmul.f32 %v580, 0.2
      %v587 = vmul.f32 %v582, 0.2
      %v588 = vsel %vm584, %v580, %v586
      %v589 = vsel %vm585, %v582, %v587
      %v592 = vcombine.low %v588, %v589
      %594 = vst [vmem:[#allocation3 + $0x4] sm:$0xff] %v592
      %v595 = vld [vmem:[#allocation3] sm:$0xff]
      %v596 = vld [vmem:[#allocation3 + $0x8] sm:$0xf]
      %597 = vrot.lane.b32.xlu0 %v274, 111
      %v598 = vpop.permute.xlu0 %597
      %v599 = vrot.slane %v598, 4
      %v600 = vsel %vm377, %v599, %v598
      %v603 = vmul.f32 %v595, %v600
      %v604 = vmul.f32 %v596, %v599
      %v607 = vcombine.high %v603, %v603
      %608 = vrot.lane.b32.xlu0 %v603, 17
      %v609 = vpop.permute.xlu0 %608
      %610 = vrot.lane.b32.xlu0 %v607, 17
      %v611 = vpop.permute.xlu0 %610
      %612 = vrot.lane.b32.xlu0 %v604, 17
      %v613 = vpop.permute.xlu0 %612
      %vm614 = vcmask 138240
      %v615 = vsel %vm614, %v609, %v611
      %v616 = vsel %vm614, %v611, %v613
      %619 = vst [vmem:[#allocation2] sm:$0xf] %v615
      %620 = vst [vmem:[#allocation2 + $0x8] sm:$0xf] %v616
      %v621 = vld [vmem:[#allocation3] sm:$0xff]
      %v622 = vld [vmem:[#allocation3 + $0x8] sm:$0xf]
      %v625 = vcombine.low %v621, %v621
      %v626 = vcombine.low %v622, %v622
      %627 = vrot.lane.b32.xlu0 %v625, 16
      %v628 = vpop.permute.xlu0 %627
      %629 = vrot.lane.b32.xlu0 %v621, 16
      %v630 = vpop.permute.xlu0 %629
      %631 = vrot.lane.b32.xlu0 %v626, 16
      %v632 = vpop.permute.xlu0 %631
      %v633 = vsel %vm343, %v628, %v630
      %v634 = vsel %vm343, %v630, %v632
      %637 = vst [vmem:[#allocation2] sm:$0xf0] %v633
      %638 = vst [vmem:[#allocation2 + $0x8] sm:$0xf0] %v634
      %v639 = vld [vmem:[#allocation3] sm:$0xff]
      %v640 = vld [vmem:[#allocation3 + $0x8] sm:$0xf]
      %641 = vrot.lane.b32.xlu0 %v312, 113
      %v642 = vpop.permute.xlu0 %641
      %v643 = vrot.slane %v642, 4
      %vm644 = vcmask 924672
      %v645 = vsel %vm644, %v643, %v642
      %v648 = vmul.f32 %v639, %v645
      %v649 = vmul.f32 %v640, %v643
      %v652 = vcombine.high %v648, %v648
      %653 = vrot.lane.b32.xlu0 %v648, 15
      %v654 = vpop.permute.xlu0 %653
      %655 = vrot.lane.b32.xlu0 %v652, 15
      %v656 = vpop.permute.xlu0 %655
      %657 = vrot.lane.b32.xlu0 %v649, 15
      %v658 = vpop.permute.xlu0 %657
      %vm659 = vcmask 121856
      %v660 = vsel %vm659, %v654, %v656
      %v661 = vsel %vm659, %v656, %v658
      %664 = vst [vmem:[#allocation2 + $0x10] sm:$0xf] %v660
      %665 = vst [vmem:[#allocation2 + $0x18] sm:$0xf] %v661
      %v666 = vld [vmem:[#allocation3] sm:$0xff]
      %v667 = vld [vmem:[#allocation3 + $0x8] sm:$0xf]
      %668 = vrot.lane.b32.xlu0 %v274, 127
      %v669 = vpop.permute.xlu0 %668
      %v670 = vrot.slane %v669, 4
      %v671 = vsel %vm294, %v670, %v669
      %v674 = vmul.f32 %v666, %v671
      %v675 = vmul.f32 %v667, %v670
      %v678 = vcombine.low %v674, %v674
      %v679 = vcombine.low %v675, %v675
      %680 = vrot.lane.b32.xlu0 %v678, 1
      %v681 = vpop.permute.xlu0 %680
      %682 = vrot.lane.b32.xlu0 %v674, 1
      %v683 = vpop.permute.xlu0 %682
      %684 = vrot.lane.b32.xlu0 %v679, 1
      %v685 = vpop.permute.xlu0 %684
      %vm686 = vcmask 7168
      %v687 = vsel %vm686, %v681, %v683
      %v688 = vsel %vm686, %v683, %v685
      %691 = vst [vmem:[#allocation2 + $0x10] sm:$0xf0] %v687
      %692 = vst [vmem:[#allocation2 + $0x18] sm:$0xf0] %v688
      %v693 = vld [vmem:[#allocation3 + $0x4] sm:$0xff]
      %v695 = vcombine.high %v693, %v693
      %697 = vst [vmem:[#allocation2 + $0x20] sm:$0xf] %v693
      %698 = vst [vmem:[#allocation2 + $0x28] sm:$0xf] %v695
      %v699 = vld [vmem:[#allocation3 + $0x4] sm:$0xff]
      %v700 = vld [vmem:[#allocation3 + $0xc] sm:$0xf]
      %701 = vrot.lane.b32.xlu0 %v312, 1
      %v702 = vpop.permute.xlu0 %701
      %v703 = vrot.slane %v702, 4
      %v704 = vsel %vm686, %v703, %v702
      %v707 = vmul.f32 %v699, %v704
      %v708 = vmul.f32 %v700, %v703
      %v711 = vcombine.low %v707, %v707
      %v712 = vcombine.low %v708, %v708
      %713 = vrot.lane.b32.xlu0 %v711, 127
      %v714 = vpop.permute.xlu0 %713
      %715 = vrot.lane.b32.xlu0 %v707, 127
      %v716 = vpop.permute.xlu0 %715
      %717 = vrot.lane.b32.xlu0 %v712, 127
      %v718 = vpop.permute.xlu0 %717
      %v719 = vsel %vm294, %v714, %v716
      %v720 = vsel %vm294, %v716, %v718
      %723 = vst [vmem:[#allocation2 + $0x20] sm:$0xf0] %v719
      %724 = vst [vmem:[#allocation2 + $0x28] sm:$0xf0] %v720
      %v725 = vld [vmem:[#allocation3 + $0x4] sm:$0xff]
      %v726 = vld [vmem:[#allocation3 + $0xc] sm:$0xf]
      %727 = vrot.lane.b32.xlu0 %v274, 15
      %v728 = vpop.permute.xlu0 %727
      %v729 = vrot.slane %v728, 4
      %v730 = vsel %vm659, %v729, %v728
      %v733 = vmul.f32 %v725, %v730
      %v734 = vmul.f32 %v726, %v729
      %v737 = vcombine.high %v733, %v733
      %738 = vrot.lane.b32.xlu0 %v733, 113
      %v739 = vpop.permute.xlu0 %738
      %740 = vrot.lane.b32.xlu0 %v737, 113
      %v741 = vpop.permute.xlu0 %740
      %742 = vrot.lane.b32.xlu0 %v734, 113
      %v743 = vpop.permute.xlu0 %742
      %v744 = vsel %vm644, %v739, %v741
      %v745 = vsel %vm644, %v741, %v743
      %748 = vst [vmem:[#allocation2 + $0x30] sm:$0xf] %v744
      %749 = vst [vmem:[#allocation2 + $0x38] sm:$0xf] %v745
      %v750 = vld [vmem:[#allocation3 + $0x4] sm:$0xff]
      %v751 = vld [vmem:[#allocation3 + $0xc] sm:$0xf]
      %v754 = vcombine.low %v750, %v750
      %v755 = vcombine.low %v751, %v751
      %756 = vrot.lane.b32.xlu0 %v754, 112
      %v757 = vpop.permute.xlu0 %756
      %758 = vrot.lane.b32.xlu0 %v750, 112
      %v759 = vpop.permute.xlu0 %758
      %760 = vrot.lane.b32.xlu0 %v755, 112
      %v761 = vpop.permute.xlu0 %760
      %v762 = vsel %vm359, %v757, %v759
      %v763 = vsel %vm359, %v759, %v761
      %766 = vst [vmem:[#allocation2 + $0x30] sm:$0xf0] %v762
      %767 = vst [vmem:[#allocation2 + $0x38] sm:$0xf0] %v763
      %v768 = vld [vmem:[#allocation3 + $0x4] sm:$0xff]
      %v769 = vld [vmem:[#allocation3 + $0xc] sm:$0xf]
      %770 = vrot.lane.b32.xlu0 %v312, 17
      %v771 = vpop.permute.xlu0 %770
      %v772 = vrot.slane %v771, 4
      %v773 = vsel %vm614, %v772, %v771
      %v776 = vmul.f32 %v768, %v773
      %v777 = vmul.f32 %v769, %v772
      %v780 = vcombine.high %v776, %v776
      %781 = vrot.lane.b32.xlu0 %v776, 111
      %v782 = vpop.permute.xlu0 %781
      %783 = vrot.lane.b32.xlu0 %v780, 111
      %v784 = vpop.permute.xlu0 %783
      %785 = vrot.lane.b32.xlu0 %v777, 111
      %v786 = vpop.permute.xlu0 %785
      %v787 = vsel %vm377, %v782, %v784
      %v788 = vsel %vm377, %v784, %v786
      %791 = vst [vmem:[#allocation2 + $0x40] sm:$0xf] %v787
      %792 = vst [vmem:[#allocation2 + $0x48] sm:$0xf] %v788
      %v793 = vld [vmem:[%s3] sm:$0xf]
      %v794 = vld [vmem:[#allocation2] sm:$0xff]
      %v795 = vld [vmem:[#allocation2 + $0x8] sm:$0xff]
      %v796 = vld [vmem:[#allocation2 + $0x10] sm:$0xff]
      %v797 = vld [vmem:[#allocation2 + $0x18] sm:$0xff]
      %v798 = vld [vmem:[#allocation2 + $0x20] sm:$0xff]
      %v799 = vld [vmem:[#allocation2 + $0x28] sm:$0xff]
      %v800 = vld [vmem:[#allocation2 + $0x30] sm:$0xff]
      %v801 = vld [vmem:[#allocation2 + $0x38] sm:$0xff]
      %v802 = vld [vmem:[#allocation2 + $0x40] sm:$0xf]
      %v803 = vld [vmem:[#allocation2 + $0x48] sm:$0xf]
      %v804 = vld [vmem:[%s4] sm:$0xf]
      %806 = vset.pattern.permute.xlu0 0
      %807 = vperm.xlu0 %806, %v804
      %v808 = vpop.permute.xlu0 %807
      %v811 = vsel %vm502, %v793, 0
      %v814 = vsel %vm506, %v802, 0
      %v817 = vsel %vm506, %v803, 0
      %819 = vmatprep.subr.mxu0 0.0
      %820 = vmatpush1.msra.mxu0 0.0
      %821 = vmatprep.subr.mxu0 0.0
      %822 = vmatpush1.msra.mxu0 0.0
      %823 = vmatprep.subr.mxu0 0.0
      %824 = vmatpush1.msra.mxu0 0.0
      %825 = vmatprep.subr.mxu0 0.0
      %826 = vmatpush1.msra.mxu0 0.0
      %827 = vmatprep.subr.mxu0 0.0
      %828 = vmatpush1.msra.mxu0 0.0
      %829 = vmatprep.subr.mxu0 0.0
      %830 = vmatpush1.msra.mxu0 0.0
      %831 = vmatprep.subr.mxu0 0.0
      %832 = vmatpush1.msra.mxu0 0.0
      %833 = vmatprep.subr.mxu0 0.0
      %834 = vmatpush1.msra.mxu0 0.0
      %835 = vmatprep.subr.mxu0 0.0
      %836 = vmatpush1.msra.mxu0 0.0
      %837 = vmatprep.subr.mxu0 0.0
      %838 = vmatpush1.msra.mxu0 0.0
      %839 = vmatprep.subr.mxu0 0.0
      %840 = vmatpush1.msra.mxu0 0.0
      %841 = vmatprep.subr.mxu0 %v817
      %842 = vmatpush1.msra.mxu0 %v814
      %843 = vmatprep.subr.mxu0 %v801
      %844 = vmatpush1.msra.mxu0 %v800
      %845 = vmatprep.subr.mxu0 %v799
      %846 = vmatpush1.msra.mxu0 %v798
      %847 = vmatprep.subr.mxu0 %v797
      %848 = vmatpush1.msra.mxu0 %v796
      %849 = vmatprep.subr.mxu0 %v795
      %850 = vmatpush1.msra.mxu0 %v794
      %851 = vmatprep.subr.mxu0 0.0
      %852 = vmatpush2.msra.mxu0 0.0
      %853 = vmatprep.subr.mxu0 0.0
      %854 = vmatpush2.msra.mxu0 0.0
      %855 = vmatprep.subr.mxu0 0.0
      %856 = vmatpush2.msra.mxu0 0.0
      %857 = vmatprep.subr.mxu0 0.0
      %858 = vmatpush2.msra.mxu0 0.0
      %859 = vmatprep.subr.mxu0 0.0
      %860 = vmatpush2.msra.mxu0 0.0
      %861 = vmatprep.subr.mxu0 0.0
      %862 = vmatpush2.msra.mxu0 0.0
      %863 = vmatprep.subr.mxu0 0.0
      %864 = vmatpush2.msra.mxu0 0.0
      %865 = vmatprep.subr.mxu0 0.0
      %866 = vmatpush2.msra.mxu0 0.0
      %867 = vmatprep.subr.mxu0 0.0
      %868 = vmatpush2.msra.mxu0 0.0
      %869 = vmatprep.subr.mxu0 0.0
      %870 = vmatpush2.msra.mxu0 0.0
      %871 = vmatprep.subr.mxu0 0.0
      %872 = vmatpush2.msra.mxu0 0.0
      %873 = vmatprep.subr.mxu0 0.0
      %874 = vmatpush2.msra.mxu0 0.0
      %875 = vmatprep.subr.mxu0 0.0
      %876 = vmatpush2.msra.mxu0 0.0
      %877 = vmatprep.subr.mxu0 0.0
      %878 = vmatpush2.msra.mxu0 0.0
      %879 = vmatprep.subr.mxu0 0.0
      %880 = vmatpush2.msra.mxu0 0.0
      %881 = vmatprep.subr.mxu0 0.0
      %882 = vmatpush2.msra.mxu0 0.0
      %883 = vmatprep.mubr.f32.mxu0 0.0
      %884 = vmatmul.mubr.f32.gmra.mxu0 %v811
      %v885 = vpop.f32.mrf.mxu0
      %v886 = vadd.f32 %v808, %v885
      %v887 = vpop.f32.mrf.mxu0
      %v888 = vadd.f32 %v808, %v887
      %889 = vdwg.mxu0
      %v890 = vld [vmem:[%s246] sm:$0xff]
      %v891 = vld [vmem:[%s246 + $0x8] sm:$0xf]
      %v894 = vcombine.high %v890, %v890
      %895 = vrot.lane.b32.xlu0 %v890, 111
      %v896 = vpop.permute.xlu0 %895
      %897 = vrot.lane.b32.xlu0 %v894, 111
      %v898 = vpop.permute.xlu0 %897
      %899 = vrot.lane.b32.xlu0 %v891, 111
      %v900 = vpop.permute.xlu0 %899
      %v901 = vsel %vm377, %v896, %v898
      %v902 = vsel %vm377, %v898, %v900
      %v905 = vadd.f32 %v886, %v901
      %v906 = vadd.f32 %v888, %v902
      %vm907 = vcmp.gt.f32.partialorder %v905, 0.0
      %vm908 = vcmp.gt.f32.partialorder %v906, 0.0
      %v909 = vmul.f32 %v905, 0.2
      %v910 = vmul.f32 %v906, 0.2
      %v911 = vsel %vm907, %v905, %v909
      %v912 = vsel %vm908, %v906, %v910
      %v915 = vcombine.low %v911, %v912
      %917 = vst [vmem:[%s251] sm:$0xff] %v915
      %p918 = scmp.lt.s32.totalorder %s17, 1
      %s919 = scalar_select %p918, %s17, 1
      %s920 = smul.addr %s919, 2
      %s921 = smul.addr %s920, 4
      %s922 = scalar_lea.vmem %s6, %s921
      // Predicated region
      $region49: #{dis_resblock_forward.1} parent=43 // pred_check
        %p923 = pneg %p166
      $region50: #{dis_resblock_forward.1} parent=43 // pred_check_branch
        %925 = sbr.rel (%p923) target = $region52
      $region51: #{dis_resblock_forward.1} parent=43 // pred_region
        _
      $region52: #{dis_resblock_forward.1} parent=43 // pred_fallthru
        _
    $region44: #{dis_resblock_forward.1} parent=5 // pred_fallthru
      _
    %p926 = scmp.le.s32.totalorder 2, %s12
    // Predicated region
    $region53: #{dis_resblock_forward.1} parent=5 // pred_check
      %p927 = pneg %p926
    $region54: #{dis_resblock_forward.1} parent=5 // pred_check_branch
      %929 = sbr.rel (%p927) target = $region56
    $region55: #{dis_resblock_forward.1} parent=5 // pred_region
      %s930 = ssub.s32 %s12, 2
      // Predicated region
      $region57: #{dis_resblock_forward.1} parent=55 // pred_check
        %p931 = pneg %p172
      $region58: #{dis_resblock_forward.1} parent=55 // pred_check_branch
        %933 = sbr.rel (%p931) target = $region60
      $region59: #{dis_resblock_forward.1} parent=55 // pred_region
        %p934 = scmp.lt.s32.totalorder %s18, 1
        %s935 = scalar_select %p934, %s18, 1
        %s936 = smul.addr %s935, 2
        %s937 = smul.addr %s936, 4
        %s938 = scalar_lea.vmem %s6, %s937
      $region60: #{dis_resblock_forward.1} parent=55 // pred_fallthru
        _
    $region56: #{dis_resblock_forward.1} parent=5 // pred_fallthru
      _
  $region6: #{dis_resblock_forward.1} parent=0 // loop_footer
    %s16 = sadd.s32 1, %s12
  $region7: #{dis_resblock_forward.1} parent=0 // loop_footer_branch
    %11 = sbr.rel target = $region3
  $region8: #{dis_resblock_forward.1} parent=0 // loop_exit
    _

</llo_original>
